<compile_context>
chip_gen: v6e
topology: v6e:2x2x1
jax: 0.10.0
libtpu: 0.0.40
codegen_flags: <defaults>
</compile_context>

<pallas_src>
import functools

import jax
import jax.numpy as jnp
from jax.experimental import pallas as pl
from jax.experimental.pallas import tpu as pltpu

IN_SHAPE = 2      # features per sample (module: in_shape)
OUT_SHAPE = 1     # outputs per sample (module: out_shape)
ROW = 128         # samples packed per lane-row of the kernel blocks
MIN_ROWS = 8      # sublane multiple -> every block is a dense multiple of (8, 128)


def _round_up(n: int, m: int) -> int:
    return ((n + m - 1) // m) * m


def _pick_tile_rows(n_rows: int, max_rows: int, min_steps: int = 4) -> int:
    """Rows (of ROW samples each) per grid step.

    Multiple of 8 sublanes, capped by the VMEM budget (max_rows), and small enough to keep
    >= min_steps pipelined steps (>= 2 per TensorCore on v7x) whenever the batch allows.
    Edge blocks absorb the ragged tail, so there is no tile-sized padding waste.
    """
    want = (pl.cdiv(n_rows, min_steps) // MIN_ROWS) * MIN_ROWS
    tile = min(max_rows, max(MIN_ROWS, want))
    return min(tile, n_rows)


def logreg_kernel(b_ref, w_ref, x_ref, o_ref):
    """sigmoid(x @ W^T + b) on one (tile_rows, 256) feature-interleaved block.

    b_ref: SMEM (1,)        f32  -- bias.
    w_ref: VMEM (256, 256)  bf16 -- [W_hi | W_lo] with W_*[2k, k] = w0_*, W_*[2k+1, k] = w1_*.
    x_ref: VMEM (tile_rows, 256) -- 128 samples per row, interleaved [f0, f1, f0, f1, ...].
    o_ref: VMEM (tile_rows, 128) -- densely packed probabilities (sample k of the row -> lane k).
    """
    x = x_ref[...].astype(jnp.float32)
    # Dekker-style hi/lo split: both matmuls run with exactly-representable bf16 operands and
    # f32 accumulation, giving ~f32-accurate logits independent of the MXU's f32 policy.
    x_hi = x.astype(jnp.bfloat16)
    x_lo = (x - x_hi.astype(jnp.float32)).astype(jnp.bfloat16)
    w = w_ref[...]
    r = jnp.dot(x_hi, w, preferred_element_type=jnp.float32)
    r = r + jnp.dot(x_lo, w, preferred_element_type=jnp.float32)
    # r = [x @ W_hi | x @ W_lo]; summing the halves applies the full-precision weights and
    # leaves logits de-interleaved and densely packed on the lanes.
    logits = r[:, :ROW] + r[:, ROW:] + b_ref[0]
    # exp on the EUP; exact reciprocal keeps tight parity with the f32 reference.
    probs = pl.reciprocal(1.0 + jnp.exp(-logits), approx=False)
    o_ref[...] = probs.astype(o_ref.dtype)


@functools.partial(jax.jit, static_argnames=("tile_samples",))
def logistic_regression(x, weight, bias, *, tile_samples: int = 262144):
    """Forward pass of the module: sigmoid(x @ weight.T + bias).

    x: (B, 2) float, weight: (1, 2), bias: (1,)  ->  (B, 1) in x.dtype.
    tile_samples: samples per pipelined grid step (per-generation tunable).  The default
      keeps ~6.3 MiB of double-buffered VMEM -- within the scoped-VMEM defaults of
      v5e (16 MiB), v6e (32 MiB) and v7x (32 of 64 MiB), so no vmem_limit override.
    """
    assert x.ndim == 2 and x.shape[1] == IN_SHAPE
    assert weight.shape == (OUT_SHAPE, IN_SHAPE) and bias.shape == (OUT_SHAPE,)
    assert tile_samples % (ROW * MIN_ROWS) == 0 and tile_samples > 0
    B = x.shape[0]

    # Pad the batch to a multiple of 1024 samples (at most 1023 zero samples; they evaluate
    # to sigmoid(b) and are sliced off below), then a free row-major reshape packs 128
    # interleaved samples per lane-row -- no transpose, no extra HBM pass over x.
    Bp = _round_up(B, ROW * MIN_ROWS)
    xp = x if Bp == B else jnp.pad(x, ((0, Bp - B), (0, 0)))
    x_packed = xp.reshape(Bp // ROW, IN_SHAPE * ROW)
    n_rows = Bp // ROW

    # (256, 256) bf16 [W_hi | W_lo]: column k of each half picks up w0*lane(2k) + w1*lane(2k+1),
    # i.e. the linear layer fused with the lane de-interleave.
    w_col = weight.astype(jnp.float32).reshape(IN_SHAPE, 1)          # [[w0], [w1]]
    w_full = jnp.kron(jnp.eye(ROW, dtype=jnp.float32), w_col)        # (256, 128) f32
    w_hi = w_full.astype(jnp.bfloat16)
    w_lo = (w_full - w_hi.astype(jnp.float32)).astype(jnp.bfloat16)
    w_cat = jnp.concatenate([w_hi, w_lo], axis=1)                    # (256, 256) bf16
    b_vec = bias.astype(jnp.float32).reshape(OUT_SHAPE)              # (1,)

    tile_rows = _pick_tile_rows(n_rows, tile_samples // ROW)
    grid = (pl.cdiv(n_rows, tile_rows),)

    out_packed = pl.pallas_call(
        logreg_kernel,
        out_shape=jax.ShapeDtypeStruct((n_rows, ROW), x.dtype),
        grid=grid,
        in_specs=[
            pl.BlockSpec(memory_space=pltpu.MemorySpace.SMEM),             # bias scalar
            pl.BlockSpec((IN_SHAPE * ROW, 2 * ROW), lambda i: (0, 0)),     # W (grid-invariant)
            pl.BlockSpec((tile_rows, IN_SHAPE * ROW), lambda i: (i, 0)),   # x row tile
        ],
        out_specs=pl.BlockSpec((tile_rows, ROW), lambda i: (i, 0)),
        compiler_params=pltpu.CompilerParams(
            # Batch axis is embarrassingly parallel -> megacore sharding on v7x; the tile
            # picker keeps >= 4 steps so both TensorCores stay fed with >= 2 buffered steps.
            dimension_semantics=("parallel",),
        ),
    )(b_vec, w_cat, x_packed)

    # Free reshapes back to (B, 1); padded samples are dropped.
    return out_packed.reshape(-1)[:B].reshape(B, OUT_SHAPE)


def init_params(key):
    """Reproduce the module __init__: weight zeroed (init.zeros_), bias ~ U(-1/sqrt(in), 1/sqrt(in))."""
    weight = jnp.zeros((OUT_SHAPE, IN_SHAPE), dtype=jnp.float32)
    bound = 1.0 / float(IN_SHAPE) ** 0.5
    bias = jax.random.uniform(
        key, (OUT_SHAPE,), minval=-bound, maxval=bound, dtype=jnp.float32
    )
    return weight, bias


if __name__ == "__main__":
    key = jax.random.PRNGKey(0)
    k_x, k_b, k_w, k_x2 = jax.random.split(key, 4)

    # Case 1: module-style init (zeroed weight, random bias), tiny batch, single grid step.
    batch = 8
    x = jax.random.normal(k_x, (batch, IN_SHAPE), dtype=jnp.float32)
    weight, bias = init_params(k_b)
    out = jax.block_until_ready(logistic_regression(x, weight, bias))
    ref = jax.nn.sigmoid(x @ weight.T + bias[None, :])
    assert out.shape == (batch, OUT_SHAPE)
    assert jnp.allclose(out, ref, atol=1e-4), "mismatch vs reference (zero-init weights)"

    # Case 2: random weights, batch not a multiple of 128, multi-step pipelined grid
    # (tile_samples=2048 -> 16-row tiles, 4 grid steps).
    batch2 = 8000
    x2 = jax.random.normal(k_x2, (batch2, IN_SHAPE), dtype=jnp.float32)
    weight2 = jax.random.normal(k_w, (OUT_SHAPE, IN_SHAPE), dtype=jnp.float32)
    out2 = jax.block_until_ready(
        logistic_regression(x2, weight2, bias, tile_samples=2048)
    )
    ref2 = jax.nn.sigmoid(x2 @ weight2.T + bias[None, :])
    assert out2.shape == (batch2, OUT_SHAPE)
    assert jnp.allclose(out2, ref2, atol=1e-4), "mismatch vs reference (random weights)"

    print("KERNEL_OK")
</pallas_src>

<mosaic_0001>
module attributes {stable_mosaic.version = 11 : i64} {
  func.func @logreg_kernel(%arg0: i32, %arg1: memref<1xf32, #tpu.memory_space<smem>>, %arg2: memref<256x256xbf16, #tpu.memory_space<vmem>>, %arg3: memref<8x256xf32, #tpu.memory_space<vmem>>, %arg4: memref<8x128xf32, #tpu.memory_space<vmem>>) attributes {dimension_semantics = [#tpu.dimension_semantics<parallel>], iteration_bounds = array<i64: 1>, scalar_prefetch = 0 : i64, scratch_operands = 0 : i64, tpu.core_type = #tpu.core_type<tc>, window_params = [{transform_indices = @transform_0, window_bounds = array<i64: 1>}, {pipeline_mode = #tpu.pipeline_mode<synchronous>, transform_indices = @transform_1, window_bounds = array<i64: 256, 256>}, {transform_indices = @transform_2, window_bounds = array<i64: 8, 256>}, {transform_indices = @transform_3, window_bounds = array<i64: 8, 128>}]} {
    %c0 = arith.constant 0 : index
    %c0_0 = arith.constant 0 : index
    %0 = vector.load %arg3[%c0, %c0_0] : memref<8x256xf32, #tpu.memory_space<vmem>>, vector<8x256xf32>
    %1 = arith.truncf %0 : vector<8x256xf32> to vector<8x256xbf16>
    %2 = arith.extf %1 : vector<8x256xbf16> to vector<8x256xf32>
    %3 = arith.subf %0, %2 : vector<8x256xf32>
    %4 = arith.truncf %3 : vector<8x256xf32> to vector<8x256xbf16>
    %c0_1 = arith.constant 0 : index
    %c0_2 = arith.constant 0 : index
    %5 = vector.load %arg2[%c0_1, %c0_2] : memref<256x256xbf16, #tpu.memory_space<vmem>>, vector<256x256xbf16>
    %cst = arith.constant dense<0.000000e+00> : vector<8x256xf32>
    %6 = tpu.matmul %1, %5, %cst {dimension_numbers = #tpu.dot_dimension_numbers<[1], [0], [0], [1], [0, 0, 1, 1], [], []>} : vector<8x256xbf16>, vector<256x256xbf16>, vector<8x256xf32> -> vector<8x256xf32>
    %cst_3 = arith.constant dense<0.000000e+00> : vector<8x256xf32>
    %7 = tpu.matmul %4, %5, %cst_3 {dimension_numbers = #tpu.dot_dimension_numbers<[1], [0], [0], [1], [0, 0, 1, 1], [], []>} : vector<8x256xbf16>, vector<256x256xbf16>, vector<8x256xf32> -> vector<8x256xf32>
    %8 = arith.addf %6, %7 : vector<8x256xf32>
    %9 = vector.extract_strided_slice %8 {offsets = [0, 0], sizes = [8, 128], strides = [1, 1]} : vector<8x256xf32> to vector<8x128xf32>
    %10 = vector.extract_strided_slice %8 {offsets = [0, 128], sizes = [8, 128], strides = [1, 1]} : vector<8x256xf32> to vector<8x128xf32>
    %11 = arith.addf %9, %10 : vector<8x128xf32>
    %c0_4 = arith.constant 0 : index
    %12 = memref.load %arg1[%c0_4] : memref<1xf32, #tpu.memory_space<smem>>
    %13 = vector.broadcast %12 : f32 to vector<8x128xf32>
    %14 = arith.addf %11, %13 : vector<8x128xf32>
    %cst_5 = arith.constant 0.000000e+00 : f32
    %15 = vector.broadcast %cst_5 : f32 to vector<8x128xf32>
    %16 = arith.subf %15, %14 : vector<8x128xf32>
    %17 = math.exp %16 : vector<8x128xf32>
    %cst_6 = arith.constant 1.000000e+00 : f32
    %18 = vector.broadcast %cst_6 : f32 to vector<8x128xf32>
    %19 = arith.addf %18, %17 : vector<8x128xf32>
    %20 = tpu.reciprocal %19 : vector<8x128xf32> -> vector<8x128xf32>
    %c0_7 = arith.constant 0 : index
    %c0_8 = arith.constant 0 : index
    %21 = vector.load %arg4[%c0_7, %c0_8] : memref<8x128xf32, #tpu.memory_space<vmem>>, vector<8x128xf32>
    tpu.vector_store %arg4[%c0_7, %c0_8], %20 {strides = array<i32>} : memref<8x128xf32, #tpu.memory_space<vmem>>, vector<8x128xf32>,
    return
  }
  func.func @transform_0(%arg0: i32) -> i32 {
    %c0_i32 = arith.constant 0 : i32
    %c0_i32_0 = arith.constant 0 : i32
    return %c0_i32 : i32
  }
  func.func @transform_1(%arg0: i32) -> (i32, i32) {
    %c0_i32 = arith.constant 0 : i32
    %c0_i32_0 = arith.constant 0 : i32
    %c0_i32_1 = arith.constant 0 : i32
    return %c0_i32, %c0_i32_0 : i32, i32
  }
  func.func @transform_2(%arg0: i32) -> (i32, i32) {
    %c0_i32 = arith.constant 0 : i32
    %c0_i32_0 = arith.constant 0 : i32
    return %arg0, %c0_i32 : i32, i32
  }
  func.func @transform_3(%arg0: i32) -> (i32, i32) {
    %c0_i32 = arith.constant 0 : i32
    %c0_i32_0 = arith.constant 0 : i32
    return %arg0, %c0_i32 : i32, i32
  }
}

</mosaic_0001>

<llo_original>
// kernel: logistic_regression.1
$region0: #{logistic_regression.1}
  #allocation0 [shape = 'u32[]', space=smem, size = 0x4, offset = 0x4, fixed_abs, tag = 'smem constant byte address 0x4 - core index']
  #allocation1 [shape = 'u32[144,128]{1,0:T(1,128)}', space=vmem, size = 0x12000, scoped, tag = 'internal scratch']
  #allocation2 [shape = 'f32[1]{0:T(128)S(6)}', space=smem, size = 0x200, scoped, tag = 'scoped memory for logistic_regression.1']
  %s0 = inlined_call_operand.<no memory space> [shape: f32[1], index: 0, kind: input, shape index: {}]
  %s1 = inlined_call_operand.vmem [shape: bf16[256,256], index: 1, kind: input, shape index: {}]
  %s2 = inlined_call_operand.vmem [shape: f32[8,256], index: 2, kind: input, shape index: {}]
  %s3 = inlined_call_operand.vmem [shape: f32[8,128], index: 3, kind: output, shape index: {}]
  %s4 = sld [smem:[#allocation0]]
  $region22: #{logistic_regression.1} parent=0
    _
  %s6 = ssub.s32 1, %s4
  %s7 = scalar_select 0, %s6, %s4
  %8 = sst [smem:[#allocation2]] %s0
  // Predicated region
  $region2: #{logistic_regression.1} parent=0 // pred_check
    _
  $region3: #{logistic_regression.1} parent=0 // pred_check_branch
    %10 = sbr.rel (0) target = $region5
  $region4: #{logistic_regression.1} parent=0 // pred_region
    _
  $region5: #{logistic_regression.1} parent=0 // pred_fallthru
    _
  // Predicated region
  $region6: #{logistic_regression.1} parent=0 // pred_check
    _
  $region7: #{logistic_regression.1} parent=0 // pred_check_branch
    %12 = sbr.rel (0) target = $region9
  $region8: #{logistic_regression.1} parent=0 // pred_region
    _
  $region9: #{logistic_regression.1} parent=0 // pred_fallthru
    _
  // Predicated region
  $region10: #{logistic_regression.1} parent=0 // pred_check
    _
  $region11: #{logistic_regression.1} parent=0 // pred_check_branch
    %14 = sbr.rel (0) target = $region13
  $region12: #{logistic_regression.1} parent=0 // pred_region
    _
  $region13: #{logistic_regression.1} parent=0 // pred_fallthru
    _
  %v15 = vld [vmem:[%s2] sm:$0xff]
  %v16 = vld [vmem:[%s2 + $0x8] sm:$0xff]
  %v17 = vpack.c.bf16 %v15, %v15
  %v18 = vpack.c.bf16 %v16, %v16
  %v19 = vunpack.c.l.bf16 %v17
  %v20 = vunpack.c.l.bf16 %v18
  %v21 = vsub.f32 %v15, %v19
  %v22 = vsub.f32 %v16, %v20
  %v23 = vpack.c.bf16 %v21, %v21
  %v24 = vpack.c.bf16 %v22, %v22
  %v25 = vld [vmem:[%s1] sm:$0xff]
  %v26 = vld [vmem:[%s1 + $0x8] sm:$0xff]
  %v27 = vld [vmem:[%s1 + $0x10] sm:$0xff]
  %v28 = vld [vmem:[%s1 + $0x18] sm:$0xff]
  %v29 = vld [vmem:[%s1 + $0x20] sm:$0xff]
  %v30 = vld [vmem:[%s1 + $0x28] sm:$0xff]
  %v31 = vld [vmem:[%s1 + $0x30] sm:$0xff]
  %v32 = vld [vmem:[%s1 + $0x38] sm:$0xff]
  %v33 = vld [vmem:[%s1 + $0x40] sm:$0xff]
  %v34 = vld [vmem:[%s1 + $0x48] sm:$0xff]
  %v35 = vld [vmem:[%s1 + $0x50] sm:$0xff]
  %v36 = vld [vmem:[%s1 + $0x58] sm:$0xff]
  %v37 = vld [vmem:[%s1 + $0x60] sm:$0xff]
  %v38 = vld [vmem:[%s1 + $0x68] sm:$0xff]
  %v39 = vld [vmem:[%s1 + $0x70] sm:$0xff]
  %v40 = vld [vmem:[%s1 + $0x78] sm:$0xff]
  %v41 = vld [vmem:[%s1 + $0x80] sm:$0xff]
  %v42 = vld [vmem:[%s1 + $0x88] sm:$0xff]
  %v43 = vld [vmem:[%s1 + $0x90] sm:$0xff]
  %v44 = vld [vmem:[%s1 + $0x98] sm:$0xff]
  %v45 = vld [vmem:[%s1 + $0xa0] sm:$0xff]
  %v46 = vld [vmem:[%s1 + $0xa8] sm:$0xff]
  %v47 = vld [vmem:[%s1 + $0xb0] sm:$0xff]
  %v48 = vld [vmem:[%s1 + $0xb8] sm:$0xff]
  %v49 = vld [vmem:[%s1 + $0xc0] sm:$0xff]
  %v50 = vld [vmem:[%s1 + $0xc8] sm:$0xff]
  %v51 = vld [vmem:[%s1 + $0xd0] sm:$0xff]
  %v52 = vld [vmem:[%s1 + $0xd8] sm:$0xff]
  %v53 = vld [vmem:[%s1 + $0xe0] sm:$0xff]
  %v54 = vld [vmem:[%s1 + $0xe8] sm:$0xff]
  %v55 = vld [vmem:[%s1 + $0xf0] sm:$0xff]
  %v56 = vld [vmem:[%s1 + $0xf8] sm:$0xff]
  %v89 = vunpack.c.l.b16 %v25
  %v90 = vunpack.c.h.b16 %v25
  %v91 = vunpack.c.l.b16 %v26
  %v92 = vunpack.c.h.b16 %v26
  %v93 = vunpack.c.l.b16 %v27
  %v94 = vunpack.c.h.b16 %v27
  %v95 = vunpack.c.l.b16 %v28
  %v96 = vunpack.c.h.b16 %v28
  %v97 = vunpack.c.l.b16 %v29
  %v98 = vunpack.c.h.b16 %v29
  %v99 = vunpack.c.l.b16 %v30
  %v100 = vunpack.c.h.b16 %v30
  %v101 = vunpack.c.l.b16 %v31
  %v102 = vunpack.c.h.b16 %v31
  %v103 = vunpack.c.l.b16 %v32
  %v104 = vunpack.c.h.b16 %v32
  %v105 = vunpack.c.l.b16 %v33
  %v106 = vunpack.c.h.b16 %v33
  %v107 = vunpack.c.l.b16 %v34
  %v108 = vunpack.c.h.b16 %v34
  %v109 = vunpack.c.l.b16 %v35
  %v110 = vunpack.c.h.b16 %v35
  %v111 = vunpack.c.l.b16 %v36
  %v112 = vunpack.c.h.b16 %v36
  %v113 = vunpack.c.l.b16 %v37
  %v114 = vunpack.c.h.b16 %v37
  %v115 = vunpack.c.l.b16 %v38
  %v116 = vunpack.c.h.b16 %v38
  %v117 = vunpack.c.l.b16 %v39
  %v118 = vunpack.c.h.b16 %v39
  %v119 = vunpack.c.l.b16 %v40
  %v120 = vunpack.c.h.b16 %v40
  %v121 = vunpack.c.l.b16 %v41
  %v122 = vunpack.c.h.b16 %v41
  %v123 = vunpack.c.l.b16 %v42
  %v124 = vunpack.c.h.b16 %v42
  %v125 = vunpack.c.l.b16 %v43
  %v126 = vunpack.c.h.b16 %v43
  %v127 = vunpack.c.l.b16 %v44
  %v128 = vunpack.c.h.b16 %v44
  %v129 = vunpack.c.l.b16 %v45
  %v130 = vunpack.c.h.b16 %v45
  %v131 = vunpack.c.l.b16 %v46
  %v132 = vunpack.c.h.b16 %v46
  %v133 = vunpack.c.l.b16 %v47
  %v134 = vunpack.c.h.b16 %v47
  %v135 = vunpack.c.l.b16 %v48
  %v136 = vunpack.c.h.b16 %v48
  %v137 = vunpack.c.l.b16 %v49
  %v138 = vunpack.c.h.b16 %v49
  %v139 = vunpack.c.l.b16 %v50
  %v140 = vunpack.c.h.b16 %v50
  %v141 = vunpack.c.l.b16 %v51
  %v142 = vunpack.c.h.b16 %v51
  %v143 = vunpack.c.l.b16 %v52
  %v144 = vunpack.c.h.b16 %v52
  %v145 = vunpack.c.l.b16 %v53
  %v146 = vunpack.c.h.b16 %v53
  %v147 = vunpack.c.l.b16 %v54
  %v148 = vunpack.c.h.b16 %v54
  %v149 = vunpack.c.l.b16 %v55
  %v150 = vunpack.c.h.b16 %v55
  %v151 = vunpack.c.l.b16 %v56
  %v152 = vunpack.c.h.b16 %v56
  %v153 = vpack.c.b16 %v91, %v89
  %v154 = vpack.c.b16 %v92, %v90
  %v155 = vpack.c.b16 %v95, %v93
  %v156 = vpack.c.b16 %v96, %v94
  %v157 = vpack.c.b16 %v99, %v97
  %v158 = vpack.c.b16 %v100, %v98
  %v159 = vpack.c.b16 %v103, %v101
  %v160 = vpack.c.b16 %v104, %v102
  %v161 = vpack.c.b16 %v107, %v105
  %v162 = vpack.c.b16 %v108, %v106
  %v163 = vpack.c.b16 %v111, %v109
  %v164 = vpack.c.b16 %v112, %v110
  %v165 = vpack.c.b16 %v115, %v113
  %v166 = vpack.c.b16 %v116, %v114
  %v167 = vpack.c.b16 %v119, %v117
  %v168 = vpack.c.b16 %v120, %v118
  %v169 = vpack.c.b16 %v123, %v121
  %v170 = vpack.c.b16 %v124, %v122
  %v171 = vpack.c.b16 %v127, %v125
  %v172 = vpack.c.b16 %v128, %v126
  %v173 = vpack.c.b16 %v131, %v129
  %v174 = vpack.c.b16 %v132, %v130
  %v175 = vpack.c.b16 %v135, %v133
  %v176 = vpack.c.b16 %v136, %v134
  %v177 = vpack.c.b16 %v139, %v137
  %v178 = vpack.c.b16 %v140, %v138
  %v179 = vpack.c.b16 %v143, %v141
  %v180 = vpack.c.b16 %v144, %v142
  %v181 = vpack.c.b16 %v147, %v145
  %v182 = vpack.c.b16 %v148, %v146
  %v183 = vpack.c.b16 %v151, %v149
  %v184 = vpack.c.b16 %v152, %v150
  %217 = vmatprep.subr.bf16.mxu0 %v168
  %218 = vmatpush1.bf16.msra.mxu0 %v167
  %219 = vmatprep.subr.bf16.mxu0 %v166
  %220 = vmatpush1.bf16.msra.mxu0 %v165
  %221 = vmatprep.subr.bf16.mxu0 %v164
  %222 = vmatpush1.bf16.msra.mxu0 %v163
  %223 = vmatprep.subr.bf16.mxu0 %v162
  %224 = vmatpush1.bf16.msra.mxu0 %v161
  %225 = vmatprep.subr.bf16.mxu0 %v160
  %226 = vmatpush1.bf16.msra.mxu0 %v159
  %227 = vmatprep.subr.bf16.mxu0 %v158
  %228 = vmatpush1.bf16.msra.mxu0 %v157
  %229 = vmatprep.subr.bf16.mxu0 %v156
  %230 = vmatpush1.bf16.msra.mxu0 %v155
  %231 = vmatprep.subr.bf16.mxu0 %v154
  %232 = vmatpush1.bf16.msra.mxu0 %v153
  %233 = vmatprep.subr.bf16.mxu0 %v184
  %234 = vmatpush2.bf16.msra.mxu0 %v183
  %235 = vmatprep.subr.bf16.mxu0 %v182
  %236 = vmatpush2.bf16.msra.mxu0 %v181
  %237 = vmatprep.subr.bf16.mxu0 %v180
  %238 = vmatpush2.bf16.msra.mxu0 %v179
  %239 = vmatprep.subr.bf16.mxu0 %v178
  %240 = vmatpush2.bf16.msra.mxu0 %v177
  %241 = vmatprep.subr.bf16.mxu0 %v176
  %242 = vmatpush2.bf16.msra.mxu0 %v175
  %243 = vmatprep.subr.bf16.mxu0 %v174
  %244 = vmatpush2.bf16.msra.mxu0 %v173
  %245 = vmatprep.subr.bf16.mxu0 %v172
  %246 = vmatpush2.bf16.msra.mxu0 %v171
  %247 = vmatprep.subr.bf16.mxu0 %v170
  %248 = vmatpush2.bf16.msra.mxu0 %v169
  %249 = vmatprep.mubr.bf16.mxu0 %v24
  %250 = vmatmul.mubr.bf16.gmra.mxu0 %v23
  %v251 = vpop.f32.mrf.mxu0
  %v252 = vadd.f32 0.0, %v251
  %v253 = vpop.f32.mrf.mxu0
  %v254 = vadd.f32 0.0, %v253
  %v255 = vpop.f32.mrf.mxu0
  %v256 = vpop.f32.mrf.mxu0
  %257 = vdwg.mxu0
  %258 = vmatprep.subr.bf16.mxu0 %v168
  %259 = vmatpush1.bf16.msra.mxu0 %v167
  %260 = vmatprep.subr.bf16.mxu0 %v166
  %261 = vmatpush1.bf16.msra.mxu0 %v165
  %262 = vmatprep.subr.bf16.mxu0 %v164
  %263 = vmatpush1.bf16.msra.mxu0 %v163
  %264 = vmatprep.subr.bf16.mxu0 %v162
  %265 = vmatpush1.bf16.msra.mxu0 %v161
  %266 = vmatprep.subr.bf16.mxu0 %v160
  %267 = vmatpush1.bf16.msra.mxu0 %v159
  %268 = vmatprep.subr.bf16.mxu0 %v158
  %269 = vmatpush1.bf16.msra.mxu0 %v157
  %270 = vmatprep.subr.bf16.mxu0 %v156
  %271 = vmatpush1.bf16.msra.mxu0 %v155
  %272 = vmatprep.subr.bf16.mxu0 %v154
  %273 = vmatpush1.bf16.msra.mxu0 %v153
  %274 = vmatprep.subr.bf16.mxu0 %v184
  %275 = vmatpush2.bf16.msra.mxu0 %v183
  %276 = vmatprep.subr.bf16.mxu0 %v182
  %277 = vmatpush2.bf16.msra.mxu0 %v181
  %278 = vmatprep.subr.bf16.mxu0 %v180
  %279 = vmatpush2.bf16.msra.mxu0 %v179
  %280 = vmatprep.subr.bf16.mxu0 %v178
  %281 = vmatpush2.bf16.msra.mxu0 %v177
  %282 = vmatprep.subr.bf16.mxu0 %v176
  %283 = vmatpush2.bf16.msra.mxu0 %v175
  %284 = vmatprep.subr.bf16.mxu0 %v174
  %285 = vmatpush2.bf16.msra.mxu0 %v173
  %286 = vmatprep.subr.bf16.mxu0 %v172
  %287 = vmatpush2.bf16.msra.mxu0 %v171
  %288 = vmatprep.subr.bf16.mxu0 %v170
  %289 = vmatpush2.bf16.msra.mxu0 %v169
  %290 = vmatprep.mubr.bf16.mxu0 %v18
  %291 = vmatmul.mubr.bf16.gmra.mxu0 %v17
  %v292 = vpop.f32.mrf.mxu0
  %v293 = vadd.f32 %v252, %v292
  %v294 = vpop.f32.mrf.mxu0
  %v295 = vadd.f32 %v254, %v294
  %v296 = vpop.f32.mrf.mxu0
  %v297 = vpop.f32.mrf.mxu0
  %298 = vdwg.mxu0
  %v299 = vadd.f32 %v293, %v295
  %s300 = sld [smem:[#allocation2]]
  %v301 = vstv %s300
  %v302 = vadd.f32 %v299, %v301
  %v303 = vsub.f32 0.0, %v302
  %v304 = vmul.f32 %v303, 1.442695
  %v305 = vpow.pop %v304
  %v306 = vadd.f32 %v305, 1.0
  %v307 = vrcp.pop %v306
  %308 = vst [vmem:[%s3] sm:$0xff] %v307
  // Predicated region
  $region14: #{logistic_regression.1} parent=0 // pred_check
    _
  $region15: #{logistic_regression.1} parent=0 // pred_check_branch
    %310 = sbr.rel (0) target = $region17
  $region16: #{logistic_regression.1} parent=0 // pred_region
    _
  $region17: #{logistic_regression.1} parent=0 // pred_fallthru
    _
  // Predicated region
  $region18: #{logistic_regression.1} parent=0 // pred_check
    _
  $region19: #{logistic_regression.1} parent=0 // pred_check_branch
    %312 = sbr.rel (0) target = $region21
  $region20: #{logistic_regression.1} parent=0 // pred_region
    _
  $region21: #{logistic_regression.1} parent=0 // pred_fallthru
    _

</llo_original>
